<compile_context>
chip_gen: v5e
topology: v5e:2x2
jax: 0.10.0
libtpu: 0.0.40
codegen_flags: <defaults>
</compile_context>

<pallas_src>
import jax
import jax.numpy as jnp
from jax.experimental import pallas as pl
from jax.experimental.pallas import tpu as pltpu

LRELU_SLOPE = 0.2
IN_EPS = 1e-5


def _leaky_relu(x):
    return jnp.where(x >= 0, x, LRELU_SLOPE * x)


# ---------------- Pallas kernels (per-sample hot path) ----------------
# p_ref: (1, K, P) bf16 patches, w_ref: (OC, K) bf16, b_ref: (OC, 1) f32,
# o_ref: (1, OC, P) f32.  P (spatial) is the lane axis.

def _conv_lrelu_kernel(p_ref, w_ref, b_ref, o_ref):
    acc = jnp.dot(w_ref[...], p_ref[0], preferred_element_type=jnp.float32)
    acc = acc + b_ref[...]
    o_ref[0] = _leaky_relu(acc)


def _conv_in_lrelu_kernel(p_ref, w_ref, b_ref, o_ref):
    # conv + InstanceNorm2d (no affine, biased var, eps=1e-5) + LeakyReLU(0.2)
    acc = jnp.dot(w_ref[...], p_ref[0], preferred_element_type=jnp.float32)
    acc = acc + b_ref[...]
    inv_p = 1.0 / acc.shape[1]
    s1 = jnp.sum(acc, axis=1, keepdims=True)            # (OC, 1)
    s2 = jnp.sum(acc * acc, axis=1, keepdims=True)      # single pass stats
    mean = s1 * inv_p
    var = jnp.maximum(s2 * inv_p - mean * mean, 0.0)
    acc = (acc - mean) * jax.lax.rsqrt(var + IN_EPS)
    o_ref[0] = _leaky_relu(acc)


def _conv_sigmoid_kernel(p_ref, w_ref, b_ref, o_ref):
    # generic fallback (OC > 1) — not used by this model's final layer
    acc = jnp.dot(w_ref[...], p_ref[0], preferred_element_type=jnp.float32)
    acc = acc + b_ref[...]
    o_ref[0] = jax.nn.sigmoid(acc)


def _conv1_sigmoid_kernel(p_ref, w_ref, b_ref, o_ref):
    # Final OC == 1 layer: skip the almost-empty MXU tile; VPU multiply +
    # sublane reduction, all in f32.  w_ref: (K, 1), b_ref: (1, 1).
    x = p_ref[0].astype(jnp.float32)                    # (K, P)
    wv = w_ref[...].astype(jnp.float32)                 # (K, 1)
    acc = jnp.sum(x * wv, axis=0, keepdims=True) + b_ref[...]   # (1, P)
    o_ref[0] = jax.nn.sigmoid(acc)


_KERNELS = {
    "lrelu": _conv_lrelu_kernel,
    "in_lrelu": _conv_in_lrelu_kernel,
    "sigmoid": _conv_sigmoid_kernel,
}


# ---------------- glue: reflect pad + im2col (plain JAX) ----------------

def _im2col_t(x, k, stride):
    # x: (N, C, H, W) -> patches (N, K, P) with K = C*k*k in (C, kh, kw) order
    # and P = OH*OW on the last (lane) axis.
    N, C, H, W = x.shape
    xp = jnp.pad(x, ((0, 0), (0, 0), (1, 1), (1, 1)), mode="reflect")
    OH = (H + 2 - k) // stride + 1
    OW = (W + 2 - k) // stride + 1
    cols = []
    for kh in range(k):
        for kw in range(k):
            cols.append(xp[:, :,
                           kh:kh + stride * (OH - 1) + 1:stride,
                           kw:kw + stride * (OW - 1) + 1:stride])
    pat = jnp.stack(cols, axis=2)              # (N, C, k*k, OH, OW)
    pat = pat.reshape(N, C * k * k, OH * OW)   # (N, K, P) — no transpose needed
    return pat, OH, OW


def _conv_layer(x, w, b, stride, kind):
    # w: (OC, C, 4, 4), b: (OC,)
    N, C, H, W = x.shape
    OC, _, k, _ = w.shape
    pat, OH, OW = _im2col_t(x, k, stride)
    P, K = OH * OW, C * k * k

    pat = pat.astype(jnp.bfloat16)             # MXU inputs in bf16, f32 accum
    bm = b.reshape(OC, 1).astype(jnp.float32)

    if kind == "sigmoid" and OC == 1:
        kern = _conv1_sigmoid_kernel
        w_arg = w.reshape(K, 1).astype(jnp.bfloat16)     # (K, 1) for VPU path
        w_spec = pl.BlockSpec((K, 1), lambda n: (0, 0))
    else:
        kern = _KERNELS[kind]
        w_arg = w.reshape(OC, K).astype(jnp.bfloat16)    # (OC, K)
        w_spec = pl.BlockSpec((OC, K), lambda n: (0, 0))

    transcendentals = N * P * OC if kind == "sigmoid" else (
        N * OC if kind == "in_lrelu" else 0)
    cost = pl.CostEstimate(
        flops=2 * N * P * K * OC,
        transcendentals=transcendentals,
        bytes_accessed=N * K * P * 2 + OC * K * 2 + OC * 4 + N * OC * P * 4,
    )

    out = pl.pallas_call(
        kern,
        out_shape=jax.ShapeDtypeStruct((N, OC, P), jnp.float32),
        grid=(N,),
        in_specs=[
            pl.BlockSpec((1, K, P), lambda n: (n, 0, 0)),
            w_spec,
            pl.BlockSpec((OC, 1), lambda n: (0, 0)),
        ],
        out_specs=pl.BlockSpec((1, OC, P), lambda n: (n, 0, 0)),
        compiler_params=pltpu.CompilerParams(dimension_semantics=("parallel",)),
        cost_estimate=cost,
    )(pat, w_arg, bm)

    # (N, OC, P) is already NCHW order — just reshape, no transpose.
    return out.reshape(N, OC, OH, OW)


# ---------------- parameter init (deterministic, matches module shapes) ----------------

def make_params(key, in_channels, features):
    specs = []
    cin = in_channels
    specs.append((cin, features[0], 2, "lrelu"))          # initial conv + LeakyReLU
    cin = features[0]
    for f in features[1:]:
        stride = 1 if f == features[-1] else 2
        specs.append((cin, f, stride, "in_lrelu"))        # Block: conv + IN + LeakyReLU
        cin = f
    specs.append((cin, 1, 1, "sigmoid"))                  # final conv, then sigmoid

    params = []
    keys = jax.random.split(key, len(specs))
    for (ci, co, stride, kind), kk in zip(specs, keys):
        kw_, kb_ = jax.random.split(kk)
        fan_in = ci * 4 * 4
        w = jax.random.normal(kw_, (co, ci, 4, 4), jnp.float32) / jnp.sqrt(fan_in)
        b = jax.random.normal(kb_, (co,), jnp.float32) * 0.01
        params.append({"w": w, "b": b, "stride": stride, "kind": kind})
    return params


def discriminator_forward(x, params):
    for p in params:
        x = _conv_layer(x, p["w"], p["b"], p["stride"], p["kind"])
    return x


# ---------------- pure-JAX reference (for correctness check) ----------------
# Mirrors the kernel's bf16-input / f32-accumulate matmul so the comparison is
# apples-to-apples.

def _conv_ref(x, w, b, stride):
    xp = jnp.pad(x, ((0, 0), (0, 0), (1, 1), (1, 1)), mode="reflect")
    xp = xp.astype(jnp.bfloat16).astype(jnp.float32)
    wf = w.astype(jnp.bfloat16).astype(jnp.float32)
    y = jax.lax.conv_general_dilated(
        xp, wf, (stride, stride), "VALID",
        dimension_numbers=("NCHW", "OIHW", "NCHW"),
        precision=jax.lax.Precision.HIGHEST)
    return y + b[None, :, None, None]


def reference_forward(x, params):
    for p in params:
        y = _conv_ref(x, p["w"], p["b"], p["stride"])
        if p["kind"] == "lrelu":
            x = jnp.where(y >= 0, y, LRELU_SLOPE * y)
        elif p["kind"] == "in_lrelu":
            mean = jnp.mean(y, axis=(2, 3), keepdims=True)
            var = jnp.mean((y - mean) ** 2, axis=(2, 3), keepdims=True)
            y = (y - mean) * jax.lax.rsqrt(var + IN_EPS)
            x = jnp.where(y >= 0, y, LRELU_SLOPE * y)
        else:
            x = jax.nn.sigmoid(y)
    return x


if __name__ == "__main__":
    key = jax.random.PRNGKey(0)
    k_x, k_p = jax.random.split(key)

    # small shapes consistent with Discriminator(in_channels=3, features=[8,16,32,64])
    N, C, H, W = 2, 3, 32, 32
    features = (8, 16, 32, 64)

    x = jax.random.normal(k_x, (N, C, H, W), jnp.float32)
    params = make_params(k_p, C, features)

    out = discriminator_forward(x, params)
    out = jax.block_until_ready(out)

    ref = jax.block_until_ready(reference_forward(x, params))

    assert out.shape == ref.shape, (out.shape, ref.shape)
    assert bool(jnp.all(jnp.isfinite(out)))
    max_diff = float(jnp.max(jnp.abs(out - ref)))
    assert max_diff < 1e-2, f"mismatch vs reference: {max_diff}"

    print("KERNEL_OK")
</pallas_src>

<mosaic_0001>
module attributes {stable_mosaic.version = 11 : i64} {
  func.func @_conv_lrelu_kernel(%arg0: i32, %arg1: memref<1x48x256xbf16, #tpu.memory_space<vmem>>, %arg2: memref<8x48xbf16, #tpu.memory_space<vmem>>, %arg3: memref<8x1xf32, #tpu.memory_space<vmem>>, %arg4: memref<1x8x256xf32, #tpu.memory_space<vmem>>) attributes {dimension_semantics = [#tpu.dimension_semantics<parallel>], iteration_bounds = array<i64: 2>, scalar_prefetch = 0 : i64, scratch_operands = 0 : i64, tpu.core_type = #tpu.core_type<tc>, window_params = [{transform_indices = @transform_0, window_bounds = array<i64: 1, 48, 256>}, {pipeline_mode = #tpu.pipeline_mode<synchronous>, transform_indices = @transform_1, window_bounds = array<i64: 8, 48>}, {pipeline_mode = #tpu.pipeline_mode<synchronous>, transform_indices = @transform_2, window_bounds = array<i64: 8, 1>}, {transform_indices = @transform_3, window_bounds = array<i64: 1, 8, 256>}]} {
    %c0 = arith.constant 0 : index
    %c0_0 = arith.constant 0 : index
    %0 = vector.load %arg2[%c0, %c0_0] : memref<8x48xbf16, #tpu.memory_space<vmem>>, vector<8x48xbf16>
    %c0_1 = arith.constant 0 : index
    %c0_2 = arith.constant 0 : index
    %c0_3 = arith.constant 0 : index
    %1 = vector.load %arg1[%c0_1, %c0_2, %c0_3] : memref<1x48x256xbf16, #tpu.memory_space<vmem>>, vector<1x48x256xbf16>
    %2 = vector.shape_cast %1 : vector<1x48x256xbf16> to vector<48x256xbf16>
    %cst = arith.constant dense<0.000000e+00> : vector<8x256xf32>
    %3 = tpu.matmul %0, %2, %cst {dimension_numbers = #tpu.dot_dimension_numbers<[1], [0], [0], [1], [0, 0, 1, 1], [], []>} : vector<8x48xbf16>, vector<48x256xbf16>, vector<8x256xf32> -> vector<8x256xf32>
    %c0_4 = arith.constant 0 : index
    %c0_5 = arith.constant 0 : index
    %4 = vector.load %arg3[%c0_4, %c0_5] : memref<8x1xf32, #tpu.memory_space<vmem>>, vector<8x1xf32>
    %5 = vector.broadcast %4 : vector<8x1xf32> to vector<8x256xf32>
    %6 = arith.addf %3, %5 : vector<8x256xf32>
    %cst_6 = arith.constant 0.000000e+00 : f32
    %7 = vector.broadcast %cst_6 : f32 to vector<8x256xf32>
    %8 = arith.cmpf oge, %6, %7 : vector<8x256xf32>
    %cst_7 = arith.constant 2.000000e-01 : f32
    %9 = vector.broadcast %cst_7 : f32 to vector<8x256xf32>
    %10 = arith.mulf %9, %6 : vector<8x256xf32>
    %11 = arith.select %8, %6, %10 : vector<8x256xi1>, vector<8x256xf32>
    %c0_8 = arith.constant 0 : index
    %c0_9 = arith.constant 0 : index
    %c0_10 = arith.constant 0 : index
    %12 = vector.load %arg4[%c0_8, %c0_9, %c0_10] : memref<1x8x256xf32, #tpu.memory_space<vmem>>, vector<1x8x256xf32>
    %13 = vector.shape_cast %12 : vector<1x8x256xf32> to vector<8x256xf32>
    %14 = vector.shape_cast %11 : vector<8x256xf32> to vector<1x8x256xf32>
    tpu.vector_store %arg4[%c0_8, %c0_9, %c0_10], %14 {strides = array<i32>} : memref<1x8x256xf32, #tpu.memory_space<vmem>>, vector<1x8x256xf32>,
    return
  }
  func.func @transform_0(%arg0: i32) -> (i32, i32, i32) {
    %c0_i32 = arith.constant 0 : i32
    %c0_i32_0 = arith.constant 0 : i32
    %c0_i32_1 = arith.constant 0 : i32
    return %arg0, %c0_i32, %c0_i32_0 : i32, i32, i32
  }
  func.func @transform_1(%arg0: i32) -> (i32, i32) {
    %c0_i32 = arith.constant 0 : i32
    %c0_i32_0 = arith.constant 0 : i32
    %c0_i32_1 = arith.constant 0 : i32
    return %c0_i32, %c0_i32_0 : i32, i32
  }
  func.func @transform_2(%arg0: i32) -> (i32, i32) {
    %c0_i32 = arith.constant 0 : i32
    %c0_i32_0 = arith.constant 0 : i32
    %c0_i32_1 = arith.constant 0 : i32
    return %c0_i32, %c0_i32_0 : i32, i32
  }
  func.func @transform_3(%arg0: i32) -> (i32, i32, i32) {
    %c0_i32 = arith.constant 0 : i32
    %c0_i32_0 = arith.constant 0 : i32
    %c0_i32_1 = arith.constant 0 : i32
    return %arg0, %c0_i32, %c0_i32_0 : i32, i32, i32
  }
}

</mosaic_0001>

<llo_original>
// kernel: tpu_custom_call.1
$region0: #{tpu_custom_call.1}
  #allocation0 [shape = 'u32[]', space=smem, size = 0x4, offset = 0x4, fixed_abs, tag = 'smem constant byte address 0x4 - core index']
  #allocation1 [shape = 'u32[72,128]{1,0:T(1,128)}', space=vmem, size = 0x9000, scoped, tag = 'internal scratch']
  %s0 = inlined_call_operand.hbm [shape: bf16[2,48,256], index: 0, kind: input, shape index: {}]
  %s1 = inlined_call_operand.vmem [shape: bf16[8,48], index: 1, kind: input, shape index: {}]
  %s2 = inlined_call_operand.vmem [shape: f32[8,1], index: 2, kind: input, shape index: {}]
  %s3 = inlined_call_operand.hbm [shape: f32[2,8,256], index: 3, kind: output, shape index: {}]
  %s4 = sld [smem:[#allocation0]]
  $region49: #{tpu_custom_call.1} parent=0
    _
  %s6 = ssub.s32 1, %s4
  %s7 = scalar_select 0, %s6, %s4
  $region1: #{tpu_custom_call.1} parent=0
    #allocation2 [shape = 'u8[49152]{0}', space=vmem, size = 0xc000, scoped, tag = 'input window, operand 0']
    #allocation3 [shape = 's32[2]{0}', space=sflag, size = 0x8, scoped, tag = 'scoped memory for tpu_custom_call.1']
    #allocation4 [shape = 's32[2]{0}', space=sflag, size = 0x8, scoped, tag = 'scoped memory for tpu_custom_call.1']
    #allocation5 [shape = 'u8[16384]{0}', space=vmem, size = 0x4000, scoped, tag = 'output window, operand 0']
    %8 = vsyncpa [#allocation3], 0
    %s9 = scalar_lea.sflag [#allocation3], 1
    %10 = vsyncpa %s9, 0
    %11 = vsyncpa [#allocation4], 0
    %s12 = scalar_lea.sflag [#allocation4], 1
    %13 = vsyncpa %s12, 0
    loop: start=0, step=1, limit=4
    $region2: #{tpu_custom_call.1} parent=1 // loop_pre_header
      _
    $region3: #{tpu_custom_call.1} parent=1 // loop_header
      %s15 = sphi 0, %s19
      %p16 = scmp.ge.s32.totalorder %s15, 4
      %s25 = sphi 0, %s27
      %s28 = sphi 0, %s25
      %s29 = sphi 0, %s28
      %s45 = sphi 0, %s29
      %s49 = sphi 0, %s49
      %s51 = sphi 0, %s49
      %s52 = sphi 0, %s51
      %s66 = sphi 0, %s52
      %s70 = sphi 0, %s70
      %s72 = sphi 0, %s70
      %s73 = sphi 0, %s72
      %s87 = sphi 0, %s73
      %s93 = sphi 0, %s95
      %s96 = sphi 0, %s93
      %s97 = sphi 0, %s96
      %s113 = sphi 0, %s97
    $region4: #{tpu_custom_call.1} parent=1 // loop_header_branch
      %18 = sbr.rel (%p16) target = $region8
    $region5: #{tpu_custom_call.1} parent=1 // loop_body
      %s20 = ssub.s32 %s15, 1
      %s21 = ssub.s32 %s15, 2
      %s22 = sadd.s32 %s15, 1
      %s23 = ssub.s32 %s15, %s22
      %p24 = scmp.eq.s32.totalorder %s23, 0
      %s26 = sadd.s32 %s25, 1
      %s27 = scalar_select %p24, %s25, %s26
      %p30 = pneg %p24
      %p31 = scmp.eq.s32.totalorder %s15, 1
      %p32 = por %p30, %p31
      %p33 = scmp.ne.s32.totalorder %s25, %s28
      %p34 = scmp.eq.s32.totalorder %s15, 0
      %p35 = por %p33, %p34
      %p36 = scmp.ne.s32.totalorder %s25, %s28
      %p37 = scmp.eq.s32.totalorder %s20, 1
      %p38 = por %p36, %p37
      %p39 = scmp.ne.s32.totalorder %s28, %s29
      %p40 = scmp.eq.s32.totalorder %s20, 0
      %p41 = por %p39, %p40
      %p42 = scmp.ne.s32.totalorder %s28, %s29
      %p43 = scmp.eq.s32.totalorder %s21, 1
      %p44 = por %p42, %p43
      %p46 = scmp.ne.s32.totalorder %s29, %s45
      %p47 = scmp.eq.s32.totalorder %s21, 0
      %p48 = por %p46, %p47
      %s50 = sadd.s32 %s49, 1
      %p53 = scmp.eq.s32.totalorder %s15, 1
      %p54 = scmp.ne.s32.totalorder %s49, %s51
      %p55 = scmp.eq.s32.totalorder %s15, 0
      %p56 = por %p54, %p55
      %p57 = scmp.ne.s32.totalorder %s49, %s51
      %p58 = scmp.eq.s32.totalorder %s20, 1
      %p59 = por %p57, %p58
      %p60 = scmp.ne.s32.totalorder %s51, %s52
      %p61 = scmp.eq.s32.totalorder %s20, 0
      %p62 = por %p60, %p61
      %p63 = scmp.ne.s32.totalorder %s51, %s52
      %p64 = scmp.eq.s32.totalorder %s21, 1
      %p65 = por %p63, %p64
      %p67 = scmp.ne.s32.totalorder %s52, %s66
      %p68 = scmp.eq.s32.totalorder %s21, 0
      %p69 = por %p67, %p68
      %s71 = sadd.s32 %s70, 1
      %p74 = scmp.eq.s32.totalorder %s15, 1
      %p75 = scmp.ne.s32.totalorder %s70, %s72
      %p76 = scmp.eq.s32.totalorder %s15, 0
      %p77 = por %p75, %p76
      %p78 = scmp.ne.s32.totalorder %s70, %s72
      %p79 = scmp.eq.s32.totalorder %s20, 1
      %p80 = por %p78, %p79
      %p81 = scmp.ne.s32.totalorder %s72, %s73
      %p82 = scmp.eq.s32.totalorder %s20, 0
      %p83 = por %p81, %p82
      %p84 = scmp.ne.s32.totalorder %s72, %s73
      %p85 = scmp.eq.s32.totalorder %s21, 1
      %p86 = por %p84, %p85
      %p88 = scmp.ne.s32.totalorder %s73, %s87
      %p89 = scmp.eq.s32.totalorder %s21, 0
      %p90 = por %p88, %p89
      %s91 = ssub.s32 %s15, %s22
      %p92 = scmp.eq.s32.totalorder %s91, 0
      %s94 = sadd.s32 %s93, 1
      %s95 = scalar_select %p92, %s93, %s94
      %p98 = pneg %p92
      %p99 = scmp.eq.s32.totalorder %s15, 1
      %p100 = por %p98, %p99
      %p101 = scmp.ne.s32.totalorder %s93, %s96
      %p102 = scmp.eq.s32.totalorder %s15, 0
      %p103 = por %p101, %p102
      %p104 = scmp.ne.s32.totalorder %s93, %s96
      %p105 = scmp.eq.s32.totalorder %s20, 1
      %p106 = por %p104, %p105
      %p107 = scmp.ne.s32.totalorder %s96, %s97
      %p108 = scmp.eq.s32.totalorder %s20, 0
      %p109 = por %p107, %p108
      %p110 = scmp.ne.s32.totalorder %s96, %s97
      %p111 = scmp.eq.s32.totalorder %s21, 1
      %p112 = por %p110, %p111
      %p114 = scmp.ne.s32.totalorder %s97, %s113
      %p115 = scmp.eq.s32.totalorder %s21, 0
      %p116 = por %p114, %p115
      %p117 = scmp.le.s32.totalorder 1, %s15
      %p118 = scmp.lt.s32.totalorder %s15, 3
      %p119 = pnand %p117, %p118
      %p120 = pneg %p119
      // Predicated region
      $region9: #{tpu_custom_call.1} parent=5 // pred_check
        _
      $region10: #{tpu_custom_call.1} parent=5 // pred_check_branch
        %122 = sbr.rel (%p119) target = $region12
      $region11: #{tpu_custom_call.1} parent=5 // pred_region
        %s123 = ssub.s32 %s15, 1
        // Predicated region
        $region13: #{tpu_custom_call.1} parent=11 // pred_check
          %p124 = pneg %p62
        $region14: #{tpu_custom_call.1} parent=11 // pred_check_branch
          %126 = sbr.rel (%p124) target = $region16
        $region15: #{tpu_custom_call.1} parent=11 // pred_region
          _
        $region16: #{tpu_custom_call.1} parent=11 // pred_fallthru
          _
        // Predicated region
        $region17: #{tpu_custom_call.1} parent=11 // pred_check
          %p127 = pneg %p83
        $region18: #{tpu_custom_call.1} parent=11 // pred_check_branch
          %129 = sbr.rel (%p127) target = $region20
        $region19: #{tpu_custom_call.1} parent=11 // pred_region
          _
        $region20: #{tpu_custom_call.1} parent=11 // pred_fallthru
          _
      $region12: #{tpu_custom_call.1} parent=5 // pred_fallthru
        _
      %p130 = scmp.lt.s32.totalorder %s15, 2
      // Predicated region
      $region21: #{tpu_custom_call.1} parent=5 // pred_check
        %p131 = pneg %p130
      $region22: #{tpu_custom_call.1} parent=5 // pred_check_branch
        %133 = sbr.rel (%p131) target = $region24
      $region23: #{tpu_custom_call.1} parent=5 // pred_region
        // Predicated region
        $region25: #{tpu_custom_call.1} parent=23 // pred_check
          %p134 = pneg %p35
        $region26: #{tpu_custom_call.1} parent=23 // pred_check_branch
          %136 = sbr.rel (%p134) target = $region28
        $region27: #{tpu_custom_call.1} parent=23 // pred_region
          %s137 = sand.u32 %s25, 1
          %s138 = scalar_lea.sflag [#allocation3], %s137
          %s139 = sand.u32 %s25, 1
          %s140 = smul.addr %s139, 48
          %s141 = scalar_lea.vmem [#allocation2], %s140
          %143 = vsyncadd %s138, 0
          %s144 = smul.addr %s15, 12
          %s145 = smul.addr %s144, 4
          %s146 = scalar_lea.hbm %s0, %s145
          %s147 = sshll.u32 %s146, 4
          %s148 = int_to_ptr.hbm [resolvable:$true] %s147
          %s149 = sshll.u32 %s141, 4
          %s150 = int_to_ptr.vmem [resolvable:$true] %s149
          %155 = dma.hbm_to_vmem [thread:$0]  %s148, 768, %s150, %s138, 128, 128, 8
        $region28: #{tpu_custom_call.1} parent=23 // pred_fallthru
          _
      $region24: #{tpu_custom_call.1} parent=5 // pred_fallthru
        _
      %p156 = scmp.le.s32.totalorder 1, %s15
      %p157 = scmp.lt.s32.totalorder %s15, 3
      %p158 = pnand %p156, %p157
      %p159 = pneg %p158
      // Predicated region
      $region29: #{tpu_custom_call.1} parent=5 // pred_check
        _
      $region30: #{tpu_custom_call.1} parent=5 // pred_check_branch
        %161 = sbr.rel (%p158) target = $region32
      $region31: #{tpu_custom_call.1} parent=5 // pred_region
        %s162 = ssub.s32 %s15, 1
        %s163 = sand.u32 %s28, 1
        %s164 = scalar_lea.sflag [#allocation3], %s163
        %s165 = sand.u32 %s28, 1
        %s166 = smul.addr %s165, 48
        %s167 = scalar_lea.vmem [#allocation2], %s166
        // Predicated region
        $region33: #{tpu_custom_call.1} parent=31 // pred_check
          %p168 = pneg %p41
        $region34: #{tpu_custom_call.1} parent=31 // pred_check_branch
          %170 = sbr.rel (%p168) target = $region36
        $region35: #{tpu_custom_call.1} parent=31 // pred_region
          %172 = dma.done %s164, 768
        $region36: #{tpu_custom_call.1} parent=31 // pred_fallthru
          _
        %s173 = sand.u32 %s28, 1
        %s174 = scalar_lea.sflag [#allocation3], %s173
        %s175 = sand.u32 %s28, 1
        %s176 = smul.addr %s175, 48
        %s177 = scalar_lea.vmem [#allocation2], %s176
        %p178 = pneg %p41
        %p179 = pneg %p38
        %p180 = pneg %p62
        %p181 = pneg %p59
        %p182 = pneg %p83
        %p183 = pneg %p80
        %p184 = pneg %p109
        %p185 = pneg %p106
        %s186 = sand.u32 %s96, 1
        %s187 = scalar_lea.sflag [#allocation4], %s186
        %s188 = sand.u32 %s96, 1
        %s189 = smul.addr %s188, 16
        %s190 = scalar_lea.vmem [#allocation5], %s189
        %v192 = vld [vmem:[%s1] sm:$0xf]
        %v193 = vld [vmem:[%s167] sm:$0xff]
        %v194 = vld [vmem:[%s167 + $0x8] sm:$0xff]
        %v195 = vld [vmem:[%s167 + $0x10] sm:$0xff]
        %v196 = vld [vmem:[%s167 + $0x18] sm:$0xff]
        %v197 = vld [vmem:[%s167 + $0x20] sm:$0xff]
        %v198 = vld [vmem:[%s167 + $0x28] sm:$0xff]
        %v199 = vld [vmem:[%s2] sm:$0xff]
        %201 = vset.pattern.permute.xlu0 0
        %202 = vperm.xlu0 %201, %v199
        %v203 = vpop.permute.xlu0 %202
        %v211 = vunpack.c.l.b16 %v193
        %v212 = vunpack.c.h.b16 %v193
        %v213 = vunpack.c.l.b16 %v194
        %v214 = vunpack.c.h.b16 %v194
        %v215 = vunpack.c.l.b16 %v195
        %v216 = vunpack.c.h.b16 %v195
        %v217 = vunpack.c.l.b16 %v196
        %v218 = vunpack.c.h.b16 %v196
        %v219 = vunpack.c.l.b16 %v197
        %v220 = vunpack.c.h.b16 %v197
        %v221 = vunpack.c.l.b16 %v198
        %v222 = vunpack.c.h.b16 %v198
        %v223 = vpack.c.b16 %v213, %v211
        %v224 = vpack.c.b16 %v214, %v212
        %v225 = vpack.c.b16 %v217, %v215
        %v226 = vpack.c.b16 %v218, %v216
        %v227 = vpack.c.b16 %v221, %v219
        %v228 = vpack.c.b16 %v222, %v220
        %vm235 = vcmask 392192
        %v237 = vsel %vm235, %v192, 0
        %239 = vmatpush.bf16.msra.mxu0 0
        %240 = vmatpush.bf16.msra.mxu0 0
        %241 = vmatpush.bf16.msra.mxu0 0
        %242 = vmatpush.bf16.msra.mxu0 0
        %243 = vmatpush.bf16.msra.mxu0 0
        %244 = vmatpush.bf16.msra.mxu0 %v227
        %245 = vmatpush.bf16.msra.mxu0 %v225
        %246 = vmatpush.bf16.msra.mxu0 %v223
        %247 = vmatmul.bf16.gmra.mxu0 %v237
        %v248 = vpop.f32.mrf.mxu0
        %v249 = vadd.f32 %v203, %v248
        %v250 = vpop.f32.mrf.mxu0
        %251 = vdwg.mxu0
        %252 = vmatpush.bf16.msra.mxu0 0
        %253 = vmatpush.bf16.msra.mxu0 0
        %254 = vmatpush.bf16.msra.mxu0 0
        %255 = vmatpush.bf16.msra.mxu0 0
        %256 = vmatpush.bf16.msra.mxu0 0
        %257 = vmatpush.bf16.msra.mxu0 %v228
        %258 = vmatpush.bf16.msra.mxu0 %v226
        %259 = vmatpush.bf16.msra.mxu0 %v224
        %260 = vmatmul.bf16.gmra.mxu0 %v237
        %v261 = vpop.f32.mrf.mxu0
        %v262 = vadd.f32 %v203, %v261
        %v263 = vpop.f32.mrf.mxu0
        %264 = vdwg.mxu0
        %vm265 = vcmp.ge.f32.partialorder %v249, 0.0
        %vm266 = vcmp.ge.f32.partialorder %v262, 0.0
        %v267 = vmul.f32 %v249, 0.2
        %v268 = vmul.f32 %v262, 0.2
        %v269 = vsel %vm265, %v249, %v267
        %v270 = vsel %vm266, %v262, %v268
        %271 = vst [vmem:[%s190] sm:$0xff] %v269
        %272 = vst [vmem:[%s190 + $0x8] sm:$0xff] %v270
        %s273 = sand.u32 %s96, 1
        %s274 = scalar_lea.sflag [#allocation4], %s273
        %s275 = sand.u32 %s96, 1
        %s276 = smul.addr %s275, 16
        %s277 = scalar_lea.vmem [#allocation5], %s276
        // Predicated region
        $region37: #{tpu_custom_call.1} parent=31 // pred_check
          %p278 = pneg %p106
        $region38: #{tpu_custom_call.1} parent=31 // pred_check_branch
          %280 = sbr.rel (%p278) target = $region40
        $region39: #{tpu_custom_call.1} parent=31 // pred_region
          %282 = vsyncadd %s274, 0
          %s283 = smul.addr %s20, 2
          %s284 = smul.addr %s283, 8
          %s285 = scalar_lea.hbm %s3, %s284
          %s287 = sshll.u32 %s277, 4
          %s288 = int_to_ptr.vmem [resolvable:$true] %s287
          %s289 = sshll.u32 %s285, 4
          %s290 = int_to_ptr.hbm [resolvable:$true] %s289
          %292 = dma.vmem_to_hbm [thread:$0]  %s288, 256, %s290, %s274
        $region40: #{tpu_custom_call.1} parent=31 // pred_fallthru
          _
      $region32: #{tpu_custom_call.1} parent=5 // pred_fallthru
        _
      %p293 = scmp.le.s32.totalorder 2, %s15
      // Predicated region
      $region41: #{tpu_custom_call.1} parent=5 // pred_check
        %p294 = pneg %p293
      $region42: #{tpu_custom_call.1} parent=5 // pred_check_branch
        %296 = sbr.rel (%p294) target = $region44
      $region43: #{tpu_custom_call.1} parent=5 // pred_region
        %s297 = ssub.s32 %s15, 2
        // Predicated region
        $region45: #{tpu_custom_call.1} parent=43 // pred_check
          %p298 = pneg %p112
        $region46: #{tpu_custom_call.1} parent=43 // pred_check_branch
          %300 = sbr.rel (%p298) target = $region48
        $region47: #{tpu_custom_call.1} parent=43 // pred_region
          %s301 = sand.u32 %s97, 1
          %s302 = scalar_lea.sflag [#allocation4], %s301
          %s303 = sand.u32 %s97, 1
          %s304 = smul.addr %s303, 16
          %s305 = scalar_lea.vmem [#allocation5], %s304
          %307 = dma.done %s302, 256
        $region48: #{tpu_custom_call.1} parent=43 // pred_fallthru
          _
      $region44: #{tpu_custom_call.1} parent=5 // pred_fallthru
        _
    $region6: #{tpu_custom_call.1} parent=1 // loop_footer
      %s19 = sadd.s32 1, %s15
    $region7: #{tpu_custom_call.1} parent=1 // loop_footer_branch
      %14 = sbr.rel target = $region3
    $region8: #{tpu_custom_call.1} parent=1 // loop_exit
      _
    %308 = vsyncpa [#allocation3], 1
    %s309 = scalar_lea.sflag [#allocation3], 1
    %310 = vsyncpa %s309, 1
    %311 = vsyncpa [#allocation4], 1
    %s312 = scalar_lea.sflag [#allocation4], 1
    %313 = vsyncpa %s312, 1

</llo_original>
